<compile_context>
chip_gen: v7x
topology: tpu7x:2x2x1
jax: 0.10.0
libtpu: 0.0.40
codegen_flags: <defaults>
</compile_context>

<pallas_src>
import functools

import jax
import jax.numpy as jnp
from jax.experimental import pallas as pl
from jax.experimental.pallas import tpu as pltpu


def _dgr_kernel(mean_ref, logvar_ref, *rest, sample):
    if sample:
        eps_ref, z_ref, kl_ref = rest
    else:
        z_ref, kl_ref = rest

    mean = mean_ref[...].astype(jnp.float32)
    logvar = jnp.clip(logvar_ref[...].astype(jnp.float32), -30.0, 20.0)
    std = jnp.exp(0.5 * logvar)
    var = std * std                      # avoid a second exp (EUP slot)

    if sample:
        z = mean + std * eps_ref[...].astype(jnp.float32)   # posterior.sample()
    else:
        z = mean                                            # posterior.mode()
    z_ref[...] = z.astype(z_ref.dtype)

    # KL integrand, reduced to a per-row partial for this lane tile.
    term = mean * mean + var - 1.0 - logvar
    row_sum = jnp.sum(term, axis=1, keepdims=True)           # (tile_b, 1)

    # Lane-dense (tile_b, 128) partial block: per-row partial in lane 0.
    lane = jax.lax.broadcasted_iota(jnp.int32, kl_ref.shape, 1)
    kl_ref[...] = jnp.where(lane == 0, row_sum, 0.0)


def _vmem_capacity_bytes():
    try:
        return int(pltpu.get_tpu_info().vmem_capacity_bytes)
    except Exception:
        return 128 << 20   # v5e / v6e default; also fine for interpret runs


def _pick_tile_b(B):
    """Full sublane groups (multiple of 8) when possible, else full batch."""
    if B > 8 and B % 8 == 0:
        return 8           # also guarantees nb >= 2 for megacore when B >= 16
    return B


def _pick_tile_d(D, tile_b, max_tile_bytes):
    """Largest multiple of 128 that divides D and keeps the tile under budget."""
    max_elems = max(128, max_tile_bytes // (4 * tile_b))
    best = 0
    t = 128
    while t <= D and t <= max_elems:
        if D % t == 0:
            best = t
        t += 128
    # Fallback for small / 128-unaligned D: one full-row block (relies on
    # padded lowering only when D is not a multiple of 128).
    return best if best > 0 else D


def diagonal_gaussian_regularizer(z, seed=0, sample=True, max_tile_bytes=None):
    """JAX/Pallas equivalent of DiagonalGaussianRegularizer.forward.

    z: (B, 2C, H, W) array.  Returns (z_out (B, C, H, W), {"kl_loss": scalar}).
    """
    B, C2, H, W = z.shape
    assert C2 % 2 == 0, "channel dim must be even (mean/logvar halves)"
    C = C2 // 2
    D = C * H * W

    vmem_cap = _vmem_capacity_bytes()
    if max_tile_bytes is None:
        # ~4 MiB tiles on 64 MiB-VMEM parts (v7x), ~8 MiB on 128 MiB parts.
        max_tile_bytes = (4 << 20) if vmem_cap <= (64 << 20) else (8 << 20)

    tile_b = _pick_tile_b(B)
    tile_d = _pick_tile_d(D, tile_b, max_tile_bytes)
    nb = B // tile_b
    nd = D // tile_d
    assert nb * tile_b == B and nd * tile_d == D

    # Free reshape: no mean/logvar copies hit HBM; the kernel windows z directly.
    z2 = z.reshape(B, 2 * D)

    kernel = functools.partial(_dgr_kernel, sample=bool(sample))

    in_specs = [
        pl.BlockSpec((tile_b, tile_d), lambda i, j: (i, j)),       # mean half
        pl.BlockSpec((tile_b, tile_d), lambda i, j: (i, j + nd)),  # logvar half
    ]
    inputs = [z2, z2]
    if sample:
        # torch.randn equivalent; generated once in the wrapper so results do
        # not depend on the tiling.
        # TODO(synk): switch to in-kernel pltpu.prng_* noise (saves the eps
        # HBM stream) once the target always runs real Mosaic lowering.
        eps = jax.random.normal(jax.random.PRNGKey(seed), (B, D), dtype=jnp.float32)
        in_specs.append(pl.BlockSpec((tile_b, tile_d), lambda i, j: (i, j)))
        inputs.append(eps)

    out_specs = [
        pl.BlockSpec((tile_b, tile_d), lambda i, j: (i, j)),       # z out
        pl.BlockSpec((tile_b, 128), lambda i, j: (i, j)),          # KL partials
    ]
    out_shape = (
        jax.ShapeDtypeStruct((B, D), z.dtype),
        jax.ShapeDtypeStruct((B, nd * 128), jnp.float32),
    )

    # VMEM budget: (streams x 2 double-buffers) x tile + slack, clamped below
    # the physical capacity of this generation.
    tile_bytes = tile_b * tile_d * 4
    n_streams = 4 if sample else 3
    vmem_need = n_streams * 2 * tile_bytes + (2 << 20)
    vmem_limit = int(min(max(vmem_need, 16 << 20), max(vmem_cap - (8 << 20), 16 << 20)))

    z_out, kl_part = pl.pallas_call(
        kernel,
        out_shape=out_shape,
        grid=(nb, nd),
        in_specs=in_specs,
        out_specs=out_specs,
        compiler_params=pltpu.CompilerParams(
            dimension_semantics=("parallel", "parallel"),
            vmem_limit_bytes=vmem_limit,
        ),
    )(*inputs)

    kl_loss = 0.5 * jnp.sum(kl_part) / B
    return z_out.reshape(B, C, H, W), {"kl_loss": kl_loss}


def _reference(z, eps):
    """Pure-JAX mirror of the PyTorch semantics (for validation)."""
    B, C2, H, W = z.shape
    C = C2 // 2
    mean = z[:, :C]
    logvar = jnp.clip(z[:, C:], -30.0, 20.0)
    std = jnp.exp(0.5 * logvar)
    var = jnp.exp(logvar)
    z_s = mean + std * eps
    kl = 0.5 * jnp.sum(mean ** 2 + var - 1.0 - logvar, axis=(1, 2, 3))
    return z_s, jnp.sum(kl) / kl.shape[0]


if __name__ == "__main__":
    B, C, H, W = 2, 4, 16, 16
    D = C * H * W
    z_in = jax.random.normal(jax.random.PRNGKey(0), (B, 2 * C, H, W), dtype=jnp.float32)

    # Reference (mode path: eps = 0); KL does not depend on eps.
    z_ref_mode, kl_ref = _reference(z_in, jnp.zeros((B, C, H, W), jnp.float32))

    # 1) Deterministic path (sample=False), default tiling: exact match.
    z_mode, log_mode = diagonal_gaussian_regularizer(z_in, seed=0, sample=False)
    z_mode, kl_mode = jax.block_until_ready((z_mode, log_mode["kl_loss"]))
    assert z_mode.shape == (B, C, H, W)
    assert jnp.allclose(z_mode, z_ref_mode, atol=1e-5, rtol=1e-5)
    assert jnp.allclose(kl_mode, kl_ref, atol=1e-4, rtol=1e-5)

    # 2) Tiny tiles -> multi-step lane grid: exercises the logvar window offset
    #    and the per-(i,j) KL partial layout.
    z_mode2, log_mode2 = diagonal_gaussian_regularizer(
        z_in, seed=0, sample=False, max_tile_bytes=4096)
    z_mode2, kl_mode2 = jax.block_until_ready((z_mode2, log_mode2["kl_loss"]))
    assert jnp.allclose(z_mode2, z_ref_mode, atol=1e-5, rtol=1e-5)
    assert jnp.allclose(kl_mode2, kl_ref, atol=1e-4, rtol=1e-5)

    # 3) Sampling path: exact match against the reference with the same eps;
    #    KL unchanged; seed-deterministic.
    seed = 1234
    eps = jax.random.normal(jax.random.PRNGKey(seed), (B, D),
                            dtype=jnp.float32).reshape(B, C, H, W)
    z_ref_s, kl_ref_s = _reference(z_in, eps)
    z_s, log_s = diagonal_gaussian_regularizer(z_in, seed=seed, sample=True)
    z_s, kl_s = jax.block_until_ready((z_s, log_s["kl_loss"]))
    assert jnp.allclose(z_s, z_ref_s, atol=1e-5, rtol=1e-5)
    assert jnp.allclose(kl_s, kl_ref_s, atol=1e-4, rtol=1e-5)
    z_s_again, _ = diagonal_gaussian_regularizer(z_in, seed=seed, sample=True)
    assert jnp.allclose(z_s, jax.block_until_ready(z_s_again))

    # 4) Larger batch (B=16) with tiny tiles: exercises tile_b=8 sublane
    #    blocks, nb>1, nd>1, and the (tile_b,128) KL partial blocks.
    B2 = 16
    z_in2 = jax.random.normal(jax.random.PRNGKey(2), (B2, 2 * C, H, W), dtype=jnp.float32)
    eps2 = jax.random.normal(jax.random.PRNGKey(7), (B2, D),
                             dtype=jnp.float32).reshape(B2, C, H, W)
    z_ref_s2, kl_ref_s2 = _reference(z_in2, eps2)
    z_s2, log_s2 = diagonal_gaussian_regularizer(
        z_in2, seed=7, sample=True, max_tile_bytes=8192)
    z_s2, kl_s2 = jax.block_until_ready((z_s2, log_s2["kl_loss"]))
    assert jnp.allclose(z_s2, z_ref_s2, atol=1e-5, rtol=1e-5)
    assert jnp.allclose(kl_s2, kl_ref_s2, atol=1e-4, rtol=1e-5)

    print("KERNEL_OK")
</pallas_src>

<mosaic_0001>
module attributes {stable_mosaic.version = 11 : i64} {
  func.func @_dgr_kernel(%arg0: i32, %arg1: i32, %arg2: memref<2x1024xf32, #tpu.memory_space<vmem>>, %arg3: memref<2x1024xf32, #tpu.memory_space<vmem>>, %arg4: memref<2x1024xf32, #tpu.memory_space<vmem>>, %arg5: memref<2x128xf32, #tpu.memory_space<vmem>>) attributes {dimension_semantics = [#tpu.dimension_semantics<parallel>, #tpu.dimension_semantics<parallel>], iteration_bounds = array<i64: 1, 1>, scalar_prefetch = 0 : i64, scratch_operands = 0 : i64, tpu.core_type = #tpu.core_type<tc>, window_params = [{transform_indices = @transform_0, window_bounds = array<i64: 2, 1024>}, {transform_indices = @transform_1, window_bounds = array<i64: 2, 1024>}, {transform_indices = @transform_2, window_bounds = array<i64: 2, 1024>}, {transform_indices = @transform_3, window_bounds = array<i64: 2, 128>}]} {
    %c0 = arith.constant 0 : index
    %c0_0 = arith.constant 0 : index
    %0 = vector.load %arg2[%c0, %c0_0] : memref<2x1024xf32, #tpu.memory_space<vmem>>, vector<2x1024xf32>
    %c0_1 = arith.constant 0 : index
    %c0_2 = arith.constant 0 : index
    %1 = vector.load %arg3[%c0_1, %c0_2] : memref<2x1024xf32, #tpu.memory_space<vmem>>, vector<2x1024xf32>
    %cst = arith.constant -3.000000e+01 : f32
    %cst_3 = arith.constant 2.000000e+01 : f32
    %2 = vector.broadcast %cst : f32 to vector<2x1024xf32>
    %3 = arith.maximumf %2, %1 : vector<2x1024xf32>
    %4 = vector.broadcast %cst_3 : f32 to vector<2x1024xf32>
    %5 = arith.minimumf %4, %3 : vector<2x1024xf32>
    %cst_4 = arith.constant 5.000000e-01 : f32
    %6 = vector.broadcast %cst_4 : f32 to vector<2x1024xf32>
    %7 = arith.mulf %6, %5 : vector<2x1024xf32>
    %8 = math.exp %7 : vector<2x1024xf32>
    %9 = arith.mulf %8, %8 : vector<2x1024xf32>
    %c0_5 = arith.constant 0 : index
    %c0_6 = arith.constant 0 : index
    %10 = vector.load %arg4[%c0_5, %c0_6] : memref<2x1024xf32, #tpu.memory_space<vmem>>, vector<2x1024xf32>
    tpu.vector_store %arg4[%c0_5, %c0_6], %0 {strides = array<i32>} : memref<2x1024xf32, #tpu.memory_space<vmem>>, vector<2x1024xf32>,
    %11 = arith.mulf %0, %0 : vector<2x1024xf32>
    %12 = arith.addf %11, %9 : vector<2x1024xf32>
    %cst_7 = arith.constant 1.000000e+00 : f32
    %13 = vector.broadcast %cst_7 : f32 to vector<2x1024xf32>
    %14 = arith.subf %12, %13 : vector<2x1024xf32>
    %15 = arith.subf %14, %5 : vector<2x1024xf32>
    %cst_8 = arith.constant dense<0.000000e+00> : vector<2xf32>
    %16 = vector.multi_reduction <add>, %15, %cst_8 [1] : vector<2x1024xf32> to vector<2xf32>
    %17 = vector.shape_cast %16 : vector<2xf32> to vector<2x1xf32>
    %18 = tpu.iota {dimensions = array<i32: 1>} : vector<2x128xi32>
    %c0_i32 = arith.constant 0 : i32
    %19 = vector.broadcast %c0_i32 : i32 to vector<2x128xi32>
    %20 = arith.cmpi eq, %18, %19 : vector<2x128xi32>
    %cst_9 = arith.constant 0.000000e+00 : f32
    %21 = vector.shape_cast %17 : vector<2x1xf32> to vector<2x1xf32>
    %22 = vector.broadcast %21 : vector<2x1xf32> to vector<2x128xf32>
    %23 = vector.broadcast %cst_9 : f32 to vector<2x128xf32>
    %24 = arith.select %20, %22, %23 : vector<2x128xi1>, vector<2x128xf32>
    %c0_10 = arith.constant 0 : index
    %c0_11 = arith.constant 0 : index
    %25 = vector.load %arg5[%c0_10, %c0_11] : memref<2x128xf32, #tpu.memory_space<vmem>>, vector<2x128xf32>
    tpu.vector_store %arg5[%c0_10, %c0_11], %24 {strides = array<i32>} : memref<2x128xf32, #tpu.memory_space<vmem>>, vector<2x128xf32>,
    return
  }
  func.func @transform_0(%arg0: i32, %arg1: i32) -> (i32, i32) {
    %c0_i32 = arith.constant 0 : i32
    return %arg0, %arg1 : i32, i32
  }
  func.func @transform_1(%arg0: i32, %arg1: i32) -> (i32, i32) {
    %c1_i32 = arith.constant 1 : i32
    %0 = arith.addi %arg1, %c1_i32 : i32
    %c0_i32 = arith.constant 0 : i32
    return %arg0, %0 : i32, i32
  }
  func.func @transform_2(%arg0: i32, %arg1: i32) -> (i32, i32) {
    %c0_i32 = arith.constant 0 : i32
    return %arg0, %arg1 : i32, i32
  }
  func.func @transform_3(%arg0: i32, %arg1: i32) -> (i32, i32) {
    %c0_i32 = arith.constant 0 : i32
    return %arg0, %arg1 : i32, i32
  }
}

</mosaic_0001>

<llo_original>
// kernel: tpu_custom_call.1
$region0: #{tpu_custom_call.1}
  #allocation0 [shape = 'u32[]', space=smem, size = 0x4, offset = 0x4, fixed_abs, tag = 'smem constant byte address 0x4 - core index']
  #allocation1 [shape = 'u32[144,128]{1,0:T(1,128)}', space=vmem, size = 0x12000, scoped, tag = 'internal scratch']
  %s0 = inlined_call_operand.hbm [shape: f32[2,2048], index: 0, kind: input, shape index: {}]
  %s1 = inlined_call_operand.hbm [shape: f32[2,2048], index: 1, kind: input, shape index: {}]
  %s2 = inlined_call_operand.hbm [shape: f32[2,1024], index: 2, kind: output, shape index: {0}]
  %s3 = inlined_call_operand.hbm [shape: f32[2,128], index: 3, kind: output, shape index: {1}]
  %4 = xla_tuple %s2, %s3
  %s5 = sld [smem:[#allocation0]]
  $region34: #{tpu_custom_call.1} parent=0
    _
  %s7 = ssub.s32 1, %s5
  %s8 = scalar_select 0, %s7, %s5
  $region1: #{tpu_custom_call.1} parent=0
    #allocation2 [shape = 'u8[8192]{0}', space=vmem, size = 0x2000, scoped, tag = 'input window, operand 0, single buffered']
    #allocation3 [shape = 's32[1]{0}', space=sflag, size = 0x4, scoped, tag = 'scoped memory for tpu_custom_call.1']
    #allocation4 [shape = 's32[1]{0}', space=sflag, size = 0x4, scoped, tag = 'scoped memory for tpu_custom_call.1']
    #allocation5 [shape = 'u8[8192]{0}', space=vmem, size = 0x2000, scoped, tag = 'input window, operand 1, single buffered']
    #allocation6 [shape = 's32[1]{0}', space=sflag, size = 0x4, scoped, tag = 'scoped memory for tpu_custom_call.1']
    #allocation7 [shape = 'u8[8192]{0}', space=vmem, size = 0x2000, scoped, tag = 'output window, operand 0, single buffered']
    #allocation8 [shape = 'u8[1024]{0}', space=vmem, size = 0x400, scoped, tag = 'output window, operand 1, single buffered']
    #allocation9 [shape = 's32[1]{0}', space=sflag, size = 0x4, scoped, tag = 'scoped memory for tpu_custom_call.1']
    %9 = vsyncpa [#allocation3], 0
    %10 = vsyncpa [#allocation6], 0
    %11 = vsyncpa [#allocation4], 0
    %12 = vsyncpa [#allocation9], 0
    // Predicated region
    $region2: #{tpu_custom_call.1} parent=1 // pred_check
      _
    $region3: #{tpu_custom_call.1} parent=1 // pred_check_branch
      %14 = sbr.rel (0) target = $region5
    $region4: #{tpu_custom_call.1} parent=1 // pred_region
      %s16 = ssub.s32 256, 256
      %17 = vsyncadd [#allocation3], %s16
      %s19 = sshll.u32 [#allocation2], 4
      %s20 = int_to_ptr.vmem [resolvable:$true] %s19
      %22 = dma.hbm_to_vmem [thread:$0]  %s0, 256, %s20, [#allocation3]
    $region5: #{tpu_custom_call.1} parent=1 // pred_fallthru
      _
    // Predicated region
    $region6: #{tpu_custom_call.1} parent=1 // pred_check
      _
    $region7: #{tpu_custom_call.1} parent=1 // pred_check_branch
      %24 = sbr.rel (0) target = $region9
    $region8: #{tpu_custom_call.1} parent=1 // pred_region
      %s25 = sadd.s32 0, 1
      %s26 = smul.u32 8, %s25
      %s28 = ssub.s32 256, 256
      %29 = vsyncadd [#allocation6], %s28
      %s30 = smul.addr %s26, 32
      %s31 = scalar_lea.hbm %s1, %s30
      %s33 = sshll.u32 [#allocation5], 4
      %s34 = int_to_ptr.vmem [resolvable:$true] %s33
      %36 = dma.hbm_to_vmem [thread:$0]  %s31, 256, %s34, [#allocation6]
    $region9: #{tpu_custom_call.1} parent=1 // pred_fallthru
      _
    // Predicated region
    $region10: #{tpu_custom_call.1} parent=1 // pred_check
      _
    $region11: #{tpu_custom_call.1} parent=1 // pred_check_branch
      %38 = sbr.rel (0) target = $region13
    $region12: #{tpu_custom_call.1} parent=1 // pred_region
      %39 = dma.done [#allocation3], 256
    $region13: #{tpu_custom_call.1} parent=1 // pred_fallthru
      _
    // Predicated region
    $region14: #{tpu_custom_call.1} parent=1 // pred_check
      _
    $region15: #{tpu_custom_call.1} parent=1 // pred_check_branch
      %41 = sbr.rel (0) target = $region17
    $region16: #{tpu_custom_call.1} parent=1 // pred_region
      %42 = dma.done [#allocation6], 256
    $region17: #{tpu_custom_call.1} parent=1 // pred_fallthru
      _
    %s43 = sadd.s32 0, 1
    %s44 = smul.u32 8, %s43
    %v45 = vld [vmem:[#allocation2] sm:$0xff]
    %v46 = vld [vmem:[#allocation2 + $0x8] sm:$0xff]
    %v47 = vld [vmem:[#allocation5] sm:$0xff]
    %v48 = vld [vmem:[#allocation5 + $0x8] sm:$0xff]
    %v49 = vmax.f32 %v47, -30.0
    %v50 = vmax.f32 %v48, -30.0
    %v51 = vmin.f32 %v49, 20.0
    %v52 = vmin.f32 %v50, 20.0
    %v53 = vmul.f32 %v51, 0.5
    %v54 = vmul.f32 %v52, 0.5
    %v55 = vmul.f32 %v53, 1.442695
    %v56 = vpow.pop %v55
    %v57 = vmul.f32 %v54, 1.442695
    %v58 = vpow.pop %v57
    %v59 = vmul.f32 %v56, %v56
    %v60 = vmul.f32 %v58, %v58
    %61 = vst [vmem:[#allocation7] sm:$0xff] %v45
    %62 = vst [vmem:[#allocation7 + $0x8] sm:$0xff] %v46
    %v63 = vmul.f32 %v45, %v45
    %v64 = vmul.f32 %v46, %v46
    %v65 = vadd.f32 %v63, %v59
    %v66 = vadd.f32 %v64, %v60
    %v67 = vsub.f32 %v65, 1.0
    %v68 = vsub.f32 %v66, 1.0
    %v69 = vsub.f32 %v67, %v51
    %v70 = vsub.f32 %v68, %v52
    %v73 = vcombine.high %v69, %v69
    %v75 = vunpack.c.l.s4 1983009808
    %v76 = vunpack.c.0.s8 %v75
    %v77 = vlaneseq
    %v78 = vshrl.u32 %v77, 7
    %v79 = vsub.s32 %v76, %v78
    %v80 = vrot.slane %v69, %v79
    %v82 = vunpack.c.l.s4 1983009808
    %v83 = vunpack.c.0.s8 %v82
    %v84 = vlaneseq
    %v85 = vshrl.u32 %v84, 7
    %v86 = vsub.s32 %v83, %v85
    %v87 = vrot.slane %v73, %v86
    %v88 = vcombine.high %v80, %v80
    %v89 = vcombine.high %v87, %v87
    %v90 = vcombine.high %v70, %v70
    %v92 = vunpack.c.l.s4 1983009808
    %v93 = vunpack.c.0.s8 %v92
    %v94 = vlaneseq
    %v95 = vshrl.u32 %v94, 7
    %v96 = vsub.s32 %v93, %v95
    %v97 = vrot.slane %v70, %v96
    %v99 = vunpack.c.l.s4 1983009808
    %v100 = vunpack.c.0.s8 %v99
    %v101 = vlaneseq
    %v102 = vshrl.u32 %v101, 7
    %v103 = vsub.s32 %v100, %v102
    %v104 = vrot.slane %v90, %v103
    %v105 = vcombine.high %v97, %v97
    %v106 = vcombine.high %v104, %v104
    %vm115 = vcmask 1041408
    %v116 = vsel %vm115, %v80, 0.0
    %v117 = vsel %vm115, %v88, 0.0
    %v118 = vadd.f32 %v116, %v117
    %v119 = vsel %vm115, %v87, 0.0
    %v120 = vadd.f32 %v118, %v119
    %v121 = vsel %vm115, %v89, 0.0
    %v122 = vadd.f32 %v120, %v121
    %v123 = vsel %vm115, %v97, 0.0
    %v124 = vadd.f32 %v122, %v123
    %v125 = vsel %vm115, %v105, 0.0
    %v126 = vadd.f32 %v124, %v125
    %v127 = vsel %vm115, %v104, 0.0
    %v128 = vadd.f32 %v126, %v127
    %v129 = vsel %vm115, %v106, 0.0
    %v130 = vadd.f32 %v128, %v129
    %131 = vadd.xlane.f32.xlu0 %v130
    %v132 = vpop.xlane.xlu0 %131
    %v133 = vlaneseq
    %v134 = vand.u32 %v133, 127
    %vm135 = vcmp.eq.s32.totalorder %v134, 0
    %v136 = vsel %vm135, %v132, 0.0
    %137 = vst [vmem:[#allocation8] sm:$0x3] %v136
    // Predicated region
    $region18: #{tpu_custom_call.1} parent=1 // pred_check
      _
    $region19: #{tpu_custom_call.1} parent=1 // pred_check_branch
      %139 = sbr.rel (0) target = $region21
    $region20: #{tpu_custom_call.1} parent=1 // pred_region
      %s141 = ssub.s32 256, 256
      %142 = vsyncadd [#allocation4], %s141
      %s144 = sshll.u32 [#allocation7], 4
      %s145 = int_to_ptr.vmem [resolvable:$true] %s144
      %147 = dma.vmem_to_hbm [thread:$0]  %s145, 256, %s2, [#allocation4]
    $region21: #{tpu_custom_call.1} parent=1 // pred_fallthru
      _
    // Predicated region
    $region22: #{tpu_custom_call.1} parent=1 // pred_check
      _
    $region23: #{tpu_custom_call.1} parent=1 // pred_check_branch
      %149 = sbr.rel (0) target = $region25
    $region24: #{tpu_custom_call.1} parent=1 // pred_region
      %s151 = ssub.s32 32, 32
      %152 = vsyncadd [#allocation9], %s151
      %s154 = sshll.u32 [#allocation8], 4
      %s155 = int_to_ptr.vmem [resolvable:$true] %s154
      %157 = dma.vmem_to_hbm [thread:$0]  %s155, 32, %s3, [#allocation9]
    $region25: #{tpu_custom_call.1} parent=1 // pred_fallthru
      _
    // Predicated region
    $region26: #{tpu_custom_call.1} parent=1 // pred_check
      _
    $region27: #{tpu_custom_call.1} parent=1 // pred_check_branch
      %159 = sbr.rel (0) target = $region29
    $region28: #{tpu_custom_call.1} parent=1 // pred_region
      %160 = dma.done [#allocation4], 256
    $region29: #{tpu_custom_call.1} parent=1 // pred_fallthru
      _
    // Predicated region
    $region30: #{tpu_custom_call.1} parent=1 // pred_check
      _
    $region31: #{tpu_custom_call.1} parent=1 // pred_check_branch
      %162 = sbr.rel (0) target = $region33
    $region32: #{tpu_custom_call.1} parent=1 // pred_region
      %163 = dma.done [#allocation9], 32
    $region33: #{tpu_custom_call.1} parent=1 // pred_fallthru
      _
    %164 = vsyncpa [#allocation3], 1
    %165 = vsyncpa [#allocation6], 1
    %166 = vsyncpa [#allocation4], 1
    %167 = vsyncpa [#allocation9], 1

</llo_original>
